<compile_context>
chip_gen: v5e
topology: v5e:2x2
jax: 0.10.0
libtpu: 0.0.40
codegen_flags: <defaults>
</compile_context>

<pallas_src>
import math

import jax
import jax.numpy as jnp
import numpy as np
from jax.experimental import pallas as pl
from jax.experimental.pallas import tpu as pltpu


# ----------------------------------------------------------------------------
# Kernel
# ----------------------------------------------------------------------------
def _make_kernel(nb, Dh, Dp, C):
    """Kernel over a block of `nb` batch elements, channel-first layout."""

    def kernel(patch_ref, cprev_ref, wg_ref, bg_ref, wo_ref,
               grad_ref, hid_ref, cell_ref):
        # patch_ref : (nb, 9*Cin, HW)  bf16  im2col patches (channel-first)
        # cprev_ref : (nb, Dh,    HW)  f32   previous cell state
        # wg_ref    : (4*Dp, 9*Cin)    bf16  gate weights, per-gate rows padded to Dp
        # bg_ref    : (4*Dp, 1)        f32   gate bias
        # wo_ref    : (C, Dh)          f32   1x1 output-conv weight
        wg = wg_ref[...]
        bg = bg_ref[...]
        wo = wo_ref[...]

        for b in range(nb):                      # static unroll; nb is 1 or small B
            patches = patch_ref[b]               # (9*Cin, HW) bf16

            # Single big MXU matmul (K = 9*Cin), f32 accumulation.
            gates = jnp.dot(wg, patches,
                            preferred_element_type=jnp.float32) + bg  # (4*Dp, HW)

            # Sublane-tile aligned gate slices (gate g occupies rows [g*Dp, g*Dp+Dh)).
            i_g = jax.nn.sigmoid(gates[0 * Dp:0 * Dp + Dh, :])
            f_g = jax.nn.sigmoid(gates[1 * Dp:1 * Dp + Dh, :])
            o_g = jax.nn.sigmoid(gates[2 * Dp:2 * Dp + Dh, :])
            g_g = jnp.tanh(gates[3 * Dp:3 * Dp + Dh, :])

            cprev = cprev_ref[b]                 # (Dh, HW) f32
            cell = f_g * cprev + i_g * g_g
            hid = o_g * jnp.tanh(cell)

            # 1x1 output conv (no bias): (C, Dh) @ (Dh, HW) -> (C, HW)
            gout = jnp.dot(wo, hid, preferred_element_type=jnp.float32)

            hid_ref[b] = hid.astype(hid_ref.dtype)
            cell_ref[b] = cell.astype(cell_ref.dtype)
            grad_ref[b] = gout.astype(grad_ref.dtype)

    return kernel


# ----------------------------------------------------------------------------
# Batch-folding heuristic (single-TC chips fold batch into one grid step)
# ----------------------------------------------------------------------------
def _fold_batch_heuristic():
    try:
        kind = jax.devices()[0].device_kind.lower()
    except Exception:
        return True
    single_tc = any(s in kind for s in
                    ("v5e", "v5 lite", "v5lite", "v6e", "v6 lite", "v6lite"))
    return single_tc


# ----------------------------------------------------------------------------
# Wrapper (NCHW in / NCHW out, like the PyTorch module)
# ----------------------------------------------------------------------------
def model_grad_update_lstm(hidden, cell, grad, params, gradnorm=1.0):
    """Forward pass of model_GradUpdateLSTM.

    hidden, cell : (B, Dh, H, W) or None
    grad         : (B, C, H, W)
    returns (grad_out (B,C,H,W), hidden (B,Dh,H,W), cell (B,Dh,H,W))
    """
    B, C, H, W = grad.shape
    Dh = params["w_gates"].shape[-1] // 4
    Cin = C + Dh
    Dp = ((Dh + 7) // 8) * 8          # per-gate row count padded to sublane multiple
    HW = H * W

    x = (grad / gradnorm).astype(jnp.float32)        # dropout(p=0.0) -> identity
    if hidden is None:
        h_prev = jnp.zeros((B, Dh, H, W), jnp.float32)
        c_prev = jnp.zeros((B, Dh, H, W), jnp.float32)
    else:
        h_prev = hidden.astype(jnp.float32)
        c_prev = cell.astype(jnp.float32)

    # im2col, channel-first: (B, 9*Cin, H*W).  Taps ordered (kh, kw), channels
    # within a tap ordered [x-channels, h_prev-channels] to match the weights.
    stacked = jnp.concatenate([x, h_prev], axis=1)                    # (B,Cin,H,W)
    spad = jnp.pad(stacked, ((0, 0), (0, 0), (1, 1), (1, 1)))         # (B,Cin,H+2,W+2)
    taps = [spad[:, :, kh:kh + H, kw:kw + W]
            for kh in range(3) for kw in range(3)]
    patches = jnp.concatenate(taps, axis=1).reshape(B, 9 * Cin, HW)
    patches = patches.astype(jnp.bfloat16)                            # MXU operands
    cprev_flat = c_prev.reshape(B, Dh, HW)                            # f32

    # Weights -> channel-first matrices; pad each gate block to Dp rows.
    wg = jnp.transpose(params["w_gates"], (3, 0, 1, 2))               # (4Dh,3,3,Cin)
    wg = wg.reshape(4, Dh, 9 * Cin)
    wg = jnp.pad(wg, ((0, 0), (0, Dp - Dh), (0, 0)))
    wg = wg.reshape(4 * Dp, 9 * Cin).astype(jnp.bfloat16)
    bg = jnp.pad(params["b_gates"].reshape(4, Dh), ((0, 0), (0, Dp - Dh)))
    bg = bg.reshape(4 * Dp, 1).astype(jnp.float32)
    wo = jnp.transpose(params["w_out"], (1, 0)).astype(jnp.float32)   # (C, Dh)

    # Batch handling: fold B into one grid step on single-TC chips, keep a
    # parallel batch grid on multi-core chips.
    nb = B if (_fold_batch_heuristic() and B <= 8) else 1
    grid = (B // nb,)
    kernel = _make_kernel(nb, Dh, Dp, C)

    grad_o, hid_o, cell_o = pl.pallas_call(
        kernel,
        out_shape=(
            jax.ShapeDtypeStruct((B, C, HW), jnp.float32),
            jax.ShapeDtypeStruct((B, Dh, HW), jnp.float32),
            jax.ShapeDtypeStruct((B, Dh, HW), jnp.float32),
        ),
        grid_spec=pltpu.PrefetchScalarGridSpec(
            num_scalar_prefetch=0,
            grid=grid,
            in_specs=[
                pl.BlockSpec((nb, 9 * Cin, HW), lambda i: (i, 0, 0)),
                pl.BlockSpec((nb, Dh, HW), lambda i: (i, 0, 0)),
                pl.BlockSpec((4 * Dp, 9 * Cin), lambda i: (0, 0)),
                pl.BlockSpec((4 * Dp, 1), lambda i: (0, 0)),
                pl.BlockSpec((C, Dh), lambda i: (0, 0)),
            ],
            out_specs=(
                pl.BlockSpec((nb, C, HW), lambda i: (i, 0, 0)),
                pl.BlockSpec((nb, Dh, HW), lambda i: (i, 0, 0)),
                pl.BlockSpec((nb, Dh, HW), lambda i: (i, 0, 0)),
            ),
        ),
        compiler_params=pltpu.CompilerParams(
            dimension_semantics=("parallel",)),
    )(patches, cprev_flat, wg, bg, wo)

    # Channel-first flat -> NCHW is a pure reshape (no transpose).
    return (grad_o.reshape(B, C, H, W),
            hid_o.reshape(B, Dh, H, W),
            cell_o.reshape(B, Dh, H, W))


# ----------------------------------------------------------------------------
# Deterministic parameter construction (matches module __init__ shapes)
# ----------------------------------------------------------------------------
def init_params(key, C, Dh):
    Cin = C + Dh
    k1, k2, k3 = jax.random.split(key, 3)
    bound_g = 1.0 / math.sqrt(Cin * 3 * 3)
    bound_o = 1.0 / math.sqrt(Dh * 1 * 1)
    return {
        # ConvLSTM2d Gates: Conv2d(Cin -> 4*Dh, 3x3, padding=1), stored HWIO
        "w_gates": jax.random.uniform(k1, (3, 3, Cin, 4 * Dh), jnp.float32,
                                      -bound_g, bound_g),
        "b_gates": jax.random.uniform(k2, (4 * Dh,), jnp.float32,
                                      -bound_g, bound_g),
        # convLayer: Conv2d(Dh -> C, 1x1, bias=False), stored (Dh, C)
        "w_out": jax.random.uniform(k3, (Dh, C), jnp.float32,
                                    -bound_o, bound_o),
    }


# ----------------------------------------------------------------------------
# Pure-JAX reference (NCHW, f32) for validation
# ----------------------------------------------------------------------------
def _reference(hidden, cell, grad, params, gradnorm=1.0):
    B, C, H, W = grad.shape
    Dh = params["w_gates"].shape[-1] // 4
    x = grad / gradnorm
    if hidden is None:
        hidden = jnp.zeros((B, Dh, H, W), jnp.float32)
        cell = jnp.zeros((B, Dh, H, W), jnp.float32)
    stacked = jnp.concatenate([x, hidden], axis=1)
    w = jnp.transpose(params["w_gates"], (3, 2, 0, 1))  # OIHW
    gates = jax.lax.conv_general_dilated(
        stacked, w, (1, 1), "SAME",
        dimension_numbers=("NCHW", "OIHW", "NCHW"))
    gates = gates + params["b_gates"][None, :, None, None]
    i_g = jax.nn.sigmoid(gates[:, 0 * Dh:1 * Dh])
    f_g = jax.nn.sigmoid(gates[:, 1 * Dh:2 * Dh])
    o_g = jax.nn.sigmoid(gates[:, 2 * Dh:3 * Dh])
    c_g = jnp.tanh(gates[:, 3 * Dh:4 * Dh])
    cell_n = f_g * cell + i_g * c_g
    hidden_n = o_g * jnp.tanh(cell_n)
    w_out = jnp.transpose(params["w_out"], (1, 0))[:, :, None, None]  # (C,Dh,1,1)
    grad_o = jax.lax.conv_general_dilated(
        hidden_n, w_out, (1, 1), "VALID",
        dimension_numbers=("NCHW", "OIHW", "NCHW"))
    return grad_o, hidden_n, cell_n


if __name__ == "__main__":
    # ShapeData = (C, H, W) = (4, 16, 16)  =>  dim_state = 5*C = 20
    B, C, H, W = 2, 4, 16, 16
    Dh = 5 * C

    key = jax.random.PRNGKey(0)
    kp, kg, kh, kc = jax.random.split(key, 4)
    params = init_params(kp, C, Dh)

    grad = jax.random.normal(kg, (B, C, H, W), jnp.float32)
    hidden = jax.random.normal(kh, (B, Dh, H, W), jnp.float32) * 0.1
    cell = jax.random.normal(kc, (B, Dh, H, W), jnp.float32) * 0.1
    gradnorm = 2.0

    fwd = jax.jit(model_grad_update_lstm)
    g_out, h_out, c_out = fwd(hidden, cell, grad, params, gradnorm)
    jax.block_until_ready((g_out, h_out, c_out))

    g_ref, h_ref, c_ref = _reference(hidden, cell, grad, params,
                                     gradnorm=gradnorm)
    # bf16 matmul operands with f32 accumulation -> widened tolerance.
    np.testing.assert_allclose(np.asarray(g_out), np.asarray(g_ref),
                               rtol=2e-2, atol=2e-2)
    np.testing.assert_allclose(np.asarray(h_out), np.asarray(h_ref),
                               rtol=2e-2, atol=2e-2)
    np.testing.assert_allclose(np.asarray(c_out), np.asarray(c_ref),
                               rtol=2e-2, atol=2e-2)

    # Also exercise the prev_state=None branch of the module.
    g2, h2, c2 = jax.jit(model_grad_update_lstm)(None, None, grad, params)
    jax.block_until_ready((g2, h2, c2))
    g2_ref, h2_ref, c2_ref = _reference(None, None, grad, params)
    np.testing.assert_allclose(np.asarray(g2), np.asarray(g2_ref),
                               rtol=2e-2, atol=2e-2)

    print("KERNEL_OK")
</pallas_src>

<mosaic_0001>
module attributes {stable_mosaic.version = 11 : i64} {
  func.func @kernel(%arg0: i32, %arg1: memref<1x216x256xbf16, #tpu.memory_space<vmem>>, %arg2: memref<1x20x256xf32, #tpu.memory_space<vmem>>, %arg3: memref<96x216xbf16, #tpu.memory_space<vmem>>, %arg4: memref<96x1xf32, #tpu.memory_space<vmem>>, %arg5: memref<4x20xf32, #tpu.memory_space<vmem>>, %arg6: memref<1x4x256xf32, #tpu.memory_space<vmem>>, %arg7: memref<1x20x256xf32, #tpu.memory_space<vmem>>, %arg8: memref<1x20x256xf32, #tpu.memory_space<vmem>>) attributes {dimension_semantics = [#tpu.dimension_semantics<parallel>], iteration_bounds = array<i64: 2>, scalar_prefetch = 0 : i64, scratch_operands = 0 : i64, tpu.core_type = #tpu.core_type<tc>, window_params = [{transform_indices = @transform_0, window_bounds = array<i64: 1, 216, 256>}, {transform_indices = @transform_1, window_bounds = array<i64: 1, 20, 256>}, {pipeline_mode = #tpu.pipeline_mode<synchronous>, transform_indices = @transform_2, window_bounds = array<i64: 96, 216>}, {pipeline_mode = #tpu.pipeline_mode<synchronous>, transform_indices = @transform_3, window_bounds = array<i64: 96, 1>}, {pipeline_mode = #tpu.pipeline_mode<synchronous>, transform_indices = @transform_4, window_bounds = array<i64: 4, 20>}, {transform_indices = @transform_5, window_bounds = array<i64: 1, 4, 256>}, {transform_indices = @transform_6, window_bounds = array<i64: 1, 20, 256>}, {transform_indices = @transform_7, window_bounds = array<i64: 1, 20, 256>}]} {
    %c0 = arith.constant 0 : index
    %c0_0 = arith.constant 0 : index
    %0 = vector.load %arg3[%c0, %c0_0] : memref<96x216xbf16, #tpu.memory_space<vmem>>, vector<96x216xbf16>
    %c0_1 = arith.constant 0 : index
    %c0_2 = arith.constant 0 : index
    %1 = vector.load %arg4[%c0_1, %c0_2] : memref<96x1xf32, #tpu.memory_space<vmem>>, vector<96x1xf32>
    %c0_3 = arith.constant 0 : index
    %c0_4 = arith.constant 0 : index
    %2 = vector.load %arg5[%c0_3, %c0_4] : memref<4x20xf32, #tpu.memory_space<vmem>>, vector<4x20xf32>
    %c0_5 = arith.constant 0 : index
    %c0_6 = arith.constant 0 : index
    %c0_7 = arith.constant 0 : index
    %3 = vector.load %arg1[%c0_5, %c0_6, %c0_7] : memref<1x216x256xbf16, #tpu.memory_space<vmem>>, vector<1x216x256xbf16>
    %4 = vector.shape_cast %3 : vector<1x216x256xbf16> to vector<216x256xbf16>
    %cst = arith.constant dense<0.000000e+00> : vector<96x256xf32>
    %5 = tpu.matmul %0, %4, %cst {dimension_numbers = #tpu.dot_dimension_numbers<[1], [0], [0], [1], [0, 0, 1, 1], [], []>} : vector<96x216xbf16>, vector<216x256xbf16>, vector<96x256xf32> -> vector<96x256xf32>
    %6 = vector.broadcast %1 : vector<96x1xf32> to vector<96x256xf32>
    %7 = arith.addf %5, %6 : vector<96x256xf32>
    %8 = vector.extract_strided_slice %7 {offsets = [0, 0], sizes = [20, 256], strides = [1, 1]} : vector<96x256xf32> to vector<20x256xf32>
    %9 = arith.negf %8 : vector<20x256xf32>
    %10 = math.exp %9 : vector<20x256xf32>
    %cst_8 = arith.constant 1.000000e+00 : f32
    %11 = vector.broadcast %cst_8 : f32 to vector<20x256xf32>
    %12 = arith.addf %11, %10 : vector<20x256xf32>
    %13 = arith.divf %11, %12 : vector<20x256xf32>
    %14 = vector.extract_strided_slice %7 {offsets = [24, 0], sizes = [20, 256], strides = [1, 1]} : vector<96x256xf32> to vector<20x256xf32>
    %15 = arith.negf %14 : vector<20x256xf32>
    %16 = math.exp %15 : vector<20x256xf32>
    %cst_9 = arith.constant 1.000000e+00 : f32
    %17 = vector.broadcast %cst_9 : f32 to vector<20x256xf32>
    %18 = arith.addf %17, %16 : vector<20x256xf32>
    %19 = arith.divf %17, %18 : vector<20x256xf32>
    %20 = vector.extract_strided_slice %7 {offsets = [48, 0], sizes = [20, 256], strides = [1, 1]} : vector<96x256xf32> to vector<20x256xf32>
    %21 = arith.negf %20 : vector<20x256xf32>
    %22 = math.exp %21 : vector<20x256xf32>
    %cst_10 = arith.constant 1.000000e+00 : f32
    %23 = vector.broadcast %cst_10 : f32 to vector<20x256xf32>
    %24 = arith.addf %23, %22 : vector<20x256xf32>
    %25 = arith.divf %23, %24 : vector<20x256xf32>
    %26 = vector.extract_strided_slice %7 {offsets = [72, 0], sizes = [20, 256], strides = [1, 1]} : vector<96x256xf32> to vector<20x256xf32>
    %27 = math.tanh %26 : vector<20x256xf32>
    %c0_11 = arith.constant 0 : index
    %c0_12 = arith.constant 0 : index
    %c0_13 = arith.constant 0 : index
    %28 = vector.load %arg2[%c0_11, %c0_12, %c0_13] : memref<1x20x256xf32, #tpu.memory_space<vmem>>, vector<1x20x256xf32>
    %29 = vector.shape_cast %28 : vector<1x20x256xf32> to vector<20x256xf32>
    %30 = arith.mulf %19, %29 : vector<20x256xf32>
    %31 = arith.mulf %13, %27 : vector<20x256xf32>
    %32 = arith.addf %30, %31 : vector<20x256xf32>
    %33 = math.tanh %32 : vector<20x256xf32>
    %34 = arith.mulf %25, %33 : vector<20x256xf32>
    %cst_14 = arith.constant dense<0.000000e+00> : vector<4x256xf32>
    %35 = tpu.matmul %2, %34, %cst_14 {dimension_numbers = #tpu.dot_dimension_numbers<[1], [0], [0], [1], [0, 0, 1, 1], [], []>} : vector<4x20xf32>, vector<20x256xf32>, vector<4x256xf32> -> vector<4x256xf32>
    %c0_15 = arith.constant 0 : index
    %c0_16 = arith.constant 0 : index
    %c0_17 = arith.constant 0 : index
    %36 = vector.load %arg7[%c0_15, %c0_16, %c0_17] : memref<1x20x256xf32, #tpu.memory_space<vmem>>, vector<1x20x256xf32>
    %37 = vector.shape_cast %36 : vector<1x20x256xf32> to vector<20x256xf32>
    %38 = vector.shape_cast %34 : vector<20x256xf32> to vector<1x20x256xf32>
    tpu.vector_store %arg7[%c0_15, %c0_16, %c0_17], %38 {strides = array<i32>} : memref<1x20x256xf32, #tpu.memory_space<vmem>>, vector<1x20x256xf32>,
    %c0_18 = arith.constant 0 : index
    %c0_19 = arith.constant 0 : index
    %c0_20 = arith.constant 0 : index
    %39 = vector.load %arg8[%c0_18, %c0_19, %c0_20] : memref<1x20x256xf32, #tpu.memory_space<vmem>>, vector<1x20x256xf32>
    %40 = vector.shape_cast %39 : vector<1x20x256xf32> to vector<20x256xf32>
    %41 = vector.shape_cast %32 : vector<20x256xf32> to vector<1x20x256xf32>
    tpu.vector_store %arg8[%c0_18, %c0_19, %c0_20], %41 {strides = array<i32>} : memref<1x20x256xf32, #tpu.memory_space<vmem>>, vector<1x20x256xf32>,
    %c0_21 = arith.constant 0 : index
    %c0_22 = arith.constant 0 : index
    %c0_23 = arith.constant 0 : index
    %42 = vector.load %arg6[%c0_21, %c0_22, %c0_23] : memref<1x4x256xf32, #tpu.memory_space<vmem>>, vector<1x4x256xf32>
    %43 = vector.shape_cast %42 : vector<1x4x256xf32> to vector<4x256xf32>
    %44 = vector.shape_cast %35 : vector<4x256xf32> to vector<1x4x256xf32>
    tpu.vector_store %arg6[%c0_21, %c0_22, %c0_23], %44 {strides = array<i32>} : memref<1x4x256xf32, #tpu.memory_space<vmem>>, vector<1x4x256xf32>,
    return
  }
  func.func @transform_0(%arg0: i32) -> (i32, i32, i32) {
    %c0_i32 = arith.constant 0 : i32
    %c0_i32_0 = arith.constant 0 : i32
    %c0_i32_1 = arith.constant 0 : i32
    return %arg0, %c0_i32, %c0_i32_0 : i32, i32, i32
  }
  func.func @transform_1(%arg0: i32) -> (i32, i32, i32) {
    %c0_i32 = arith.constant 0 : i32
    %c0_i32_0 = arith.constant 0 : i32
    %c0_i32_1 = arith.constant 0 : i32
    return %arg0, %c0_i32, %c0_i32_0 : i32, i32, i32
  }
  func.func @transform_2(%arg0: i32) -> (i32, i32) {
    %c0_i32 = arith.constant 0 : i32
    %c0_i32_0 = arith.constant 0 : i32
    %c0_i32_1 = arith.constant 0 : i32
    return %c0_i32, %c0_i32_0 : i32, i32
  }
  func.func @transform_3(%arg0: i32) -> (i32, i32) {
    %c0_i32 = arith.constant 0 : i32
    %c0_i32_0 = arith.constant 0 : i32
    %c0_i32_1 = arith.constant 0 : i32
    return %c0_i32, %c0_i32_0 : i32, i32
  }
  func.func @transform_4(%arg0: i32) -> (i32, i32) {
    %c0_i32 = arith.constant 0 : i32
    %c0_i32_0 = arith.constant 0 : i32
    %c0_i32_1 = arith.constant 0 : i32
    return %c0_i32, %c0_i32_0 : i32, i32
  }
  func.func @transform_5(%arg0: i32) -> (i32, i32, i32) {
    %c0_i32 = arith.constant 0 : i32
    %c0_i32_0 = arith.constant 0 : i32
    %c0_i32_1 = arith.constant 0 : i32
    return %arg0, %c0_i32, %c0_i32_0 : i32, i32, i32
  }
  func.func @transform_6(%arg0: i32) -> (i32, i32, i32) {
    %c0_i32 = arith.constant 0 : i32
    %c0_i32_0 = arith.constant 0 : i32
    %c0_i32_1 = arith.constant 0 : i32
    return %arg0, %c0_i32, %c0_i32_0 : i32, i32, i32
  }
  func.func @transform_7(%arg0: i32) -> (i32, i32, i32) {
    %c0_i32 = arith.constant 0 : i32
    %c0_i32_0 = arith.constant 0 : i32
    %c0_i32_1 = arith.constant 0 : i32
    return %arg0, %c0_i32, %c0_i32_0 : i32, i32, i32
  }
}

</mosaic_0001>

<llo_original>
// kernel: model_grad_update_lstm.1
$region0: #{model_grad_update_lstm.1}
  #allocation0 [shape = 'u32[]', space=smem, size = 0x4, offset = 0x4, fixed_abs, tag = 'smem constant byte address 0x4 - core index']
  #allocation1 [shape = 'u32[72,128]{1,0:T(1,128)}', space=vmem, size = 0x9000, scoped, tag = 'internal scratch']
  %s0 = inlined_call_operand.vmem [shape: bf16[2,216,256], index: 0, kind: input, shape index: {}]
  %s1 = inlined_call_operand.vmem [shape: f32[2,20,256], index: 1, kind: input, shape index: {}]
  %s2 = inlined_call_operand.vmem [shape: bf16[96,216], index: 2, kind: input, shape index: {}]
  %s3 = inlined_call_operand.vmem [shape: f32[96,1], index: 3, kind: input, shape index: {}]
  %s4 = inlined_call_operand.vmem [shape: f32[4,20], index: 4, kind: input, shape index: {}]
  %s5 = inlined_call_operand.vmem [shape: f32[2,4,256], index: 5, kind: output, shape index: {0}]
  %s6 = inlined_call_operand.vmem [shape: f32[2,20,256], index: 6, kind: output, shape index: {1}]
  %s7 = inlined_call_operand.vmem [shape: f32[2,20,256], index: 7, kind: output, shape index: {2}]
  %8 = xla_tuple %s5, %s6, %s7
  %s9 = sld [smem:[#allocation0]]
  $region69: #{model_grad_update_lstm.1} parent=0
    _
  %s11 = ssub.s32 1, %s9
  %s12 = scalar_select 0, %s11, %s9
  loop: start=0, step=1, limit=4
  $region2: #{model_grad_update_lstm.1} parent=0 // loop_pre_header
    _
  $region3: #{model_grad_update_lstm.1} parent=0 // loop_header
    %s14 = sphi 0, %s18
    %p15 = scmp.ge.s32.totalorder %s14, 4
    %s24 = sphi 0, %s26
    %s27 = sphi 0, %s24
    %s28 = sphi 0, %s27
    %s44 = sphi 0, %s28
    %s50 = sphi 0, %s52
    %s53 = sphi 0, %s50
    %s54 = sphi 0, %s53
    %s70 = sphi 0, %s54
    %s74 = sphi 0, %s74
    %s76 = sphi 0, %s74
    %s77 = sphi 0, %s76
    %s91 = sphi 0, %s77
    %s95 = sphi 0, %s95
    %s97 = sphi 0, %s95
    %s98 = sphi 0, %s97
    %s112 = sphi 0, %s98
    %s116 = sphi 0, %s116
    %s118 = sphi 0, %s116
    %s119 = sphi 0, %s118
    %s133 = sphi 0, %s119
    %s139 = sphi 0, %s141
    %s142 = sphi 0, %s139
    %s143 = sphi 0, %s142
    %s159 = sphi 0, %s143
    %s165 = sphi 0, %s167
    %s168 = sphi 0, %s165
    %s169 = sphi 0, %s168
    %s185 = sphi 0, %s169
    %s191 = sphi 0, %s193
    %s194 = sphi 0, %s191
    %s195 = sphi 0, %s194
    %s211 = sphi 0, %s195
  $region4: #{model_grad_update_lstm.1} parent=0 // loop_header_branch
    %17 = sbr.rel (%p15) target = $region8
  $region5: #{model_grad_update_lstm.1} parent=0 // loop_body
    %s19 = ssub.s32 %s14, 1
    %s20 = ssub.s32 %s14, 2
    %s21 = sadd.s32 %s14, 1
    %s22 = ssub.s32 %s14, %s21
    %p23 = scmp.eq.s32.totalorder %s22, 0
    %s25 = sadd.s32 %s24, 1
    %s26 = scalar_select %p23, %s24, %s25
    %p29 = pneg %p23
    %p30 = scmp.eq.s32.totalorder %s14, 1
    %p31 = por %p29, %p30
    %p32 = scmp.ne.s32.totalorder %s24, %s27
    %p33 = scmp.eq.s32.totalorder %s14, 0
    %p34 = por %p32, %p33
    %p35 = scmp.ne.s32.totalorder %s24, %s27
    %p36 = scmp.eq.s32.totalorder %s19, 1
    %p37 = por %p35, %p36
    %p38 = scmp.ne.s32.totalorder %s27, %s28
    %p39 = scmp.eq.s32.totalorder %s19, 0
    %p40 = por %p38, %p39
    %p41 = scmp.ne.s32.totalorder %s27, %s28
    %p42 = scmp.eq.s32.totalorder %s20, 1
    %p43 = por %p41, %p42
    %p45 = scmp.ne.s32.totalorder %s28, %s44
    %p46 = scmp.eq.s32.totalorder %s20, 0
    %p47 = por %p45, %p46
    %s48 = ssub.s32 %s14, %s21
    %p49 = scmp.eq.s32.totalorder %s48, 0
    %s51 = sadd.s32 %s50, 1
    %s52 = scalar_select %p49, %s50, %s51
    %p55 = pneg %p49
    %p56 = scmp.eq.s32.totalorder %s14, 1
    %p57 = por %p55, %p56
    %p58 = scmp.ne.s32.totalorder %s50, %s53
    %p59 = scmp.eq.s32.totalorder %s14, 0
    %p60 = por %p58, %p59
    %p61 = scmp.ne.s32.totalorder %s50, %s53
    %p62 = scmp.eq.s32.totalorder %s19, 1
    %p63 = por %p61, %p62
    %p64 = scmp.ne.s32.totalorder %s53, %s54
    %p65 = scmp.eq.s32.totalorder %s19, 0
    %p66 = por %p64, %p65
    %p67 = scmp.ne.s32.totalorder %s53, %s54
    %p68 = scmp.eq.s32.totalorder %s20, 1
    %p69 = por %p67, %p68
    %p71 = scmp.ne.s32.totalorder %s54, %s70
    %p72 = scmp.eq.s32.totalorder %s20, 0
    %p73 = por %p71, %p72
    %s75 = sadd.s32 %s74, 1
    %p78 = scmp.eq.s32.totalorder %s14, 1
    %p79 = scmp.ne.s32.totalorder %s74, %s76
    %p80 = scmp.eq.s32.totalorder %s14, 0
    %p81 = por %p79, %p80
    %p82 = scmp.ne.s32.totalorder %s74, %s76
    %p83 = scmp.eq.s32.totalorder %s19, 1
    %p84 = por %p82, %p83
    %p85 = scmp.ne.s32.totalorder %s76, %s77
    %p86 = scmp.eq.s32.totalorder %s19, 0
    %p87 = por %p85, %p86
    %p88 = scmp.ne.s32.totalorder %s76, %s77
    %p89 = scmp.eq.s32.totalorder %s20, 1
    %p90 = por %p88, %p89
    %p92 = scmp.ne.s32.totalorder %s77, %s91
    %p93 = scmp.eq.s32.totalorder %s20, 0
    %p94 = por %p92, %p93
    %s96 = sadd.s32 %s95, 1
    %p99 = scmp.eq.s32.totalorder %s14, 1
    %p100 = scmp.ne.s32.totalorder %s95, %s97
    %p101 = scmp.eq.s32.totalorder %s14, 0
    %p102 = por %p100, %p101
    %p103 = scmp.ne.s32.totalorder %s95, %s97
    %p104 = scmp.eq.s32.totalorder %s19, 1
    %p105 = por %p103, %p104
    %p106 = scmp.ne.s32.totalorder %s97, %s98
    %p107 = scmp.eq.s32.totalorder %s19, 0
    %p108 = por %p106, %p107
    %p109 = scmp.ne.s32.totalorder %s97, %s98
    %p110 = scmp.eq.s32.totalorder %s20, 1
    %p111 = por %p109, %p110
    %p113 = scmp.ne.s32.totalorder %s98, %s112
    %p114 = scmp.eq.s32.totalorder %s20, 0
    %p115 = por %p113, %p114
    %s117 = sadd.s32 %s116, 1
    %p120 = scmp.eq.s32.totalorder %s14, 1
    %p121 = scmp.ne.s32.totalorder %s116, %s118
    %p122 = scmp.eq.s32.totalorder %s14, 0
    %p123 = por %p121, %p122
    %p124 = scmp.ne.s32.totalorder %s116, %s118
    %p125 = scmp.eq.s32.totalorder %s19, 1
    %p126 = por %p124, %p125
    %p127 = scmp.ne.s32.totalorder %s118, %s119
    %p128 = scmp.eq.s32.totalorder %s19, 0
    %p129 = por %p127, %p128
    %p130 = scmp.ne.s32.totalorder %s118, %s119
    %p131 = scmp.eq.s32.totalorder %s20, 1
    %p132 = por %p130, %p131
    %p134 = scmp.ne.s32.totalorder %s119, %s133
    %p135 = scmp.eq.s32.totalorder %s20, 0
    %p136 = por %p134, %p135
    %s137 = ssub.s32 %s14, %s21
    %p138 = scmp.eq.s32.totalorder %s137, 0
    %s140 = sadd.s32 %s139, 1
    %s141 = scalar_select %p138, %s139, %s140
    %p144 = pneg %p138
    %p145 = scmp.eq.s32.totalorder %s14, 1
    %p146 = por %p144, %p145
    %p147 = scmp.ne.s32.totalorder %s139, %s142
    %p148 = scmp.eq.s32.totalorder %s14, 0
    %p149 = por %p147, %p148
    %p150 = scmp.ne.s32.totalorder %s139, %s142
    %p151 = scmp.eq.s32.totalorder %s19, 1
    %p152 = por %p150, %p151
    %p153 = scmp.ne.s32.totalorder %s142, %s143
    %p154 = scmp.eq.s32.totalorder %s19, 0
    %p155 = por %p153, %p154
    %p156 = scmp.ne.s32.totalorder %s142, %s143
    %p157 = scmp.eq.s32.totalorder %s20, 1
    %p158 = por %p156, %p157
    %p160 = scmp.ne.s32.totalorder %s143, %s159
    %p161 = scmp.eq.s32.totalorder %s20, 0
    %p162 = por %p160, %p161
    %s163 = ssub.s32 %s14, %s21
    %p164 = scmp.eq.s32.totalorder %s163, 0
    %s166 = sadd.s32 %s165, 1
    %s167 = scalar_select %p164, %s165, %s166
    %p170 = pneg %p164
    %p171 = scmp.eq.s32.totalorder %s14, 1
    %p172 = por %p170, %p171
    %p173 = scmp.ne.s32.totalorder %s165, %s168
    %p174 = scmp.eq.s32.totalorder %s14, 0
    %p175 = por %p173, %p174
    %p176 = scmp.ne.s32.totalorder %s165, %s168
    %p177 = scmp.eq.s32.totalorder %s19, 1
    %p178 = por %p176, %p177
    %p179 = scmp.ne.s32.totalorder %s168, %s169
    %p180 = scmp.eq.s32.totalorder %s19, 0
    %p181 = por %p179, %p180
    %p182 = scmp.ne.s32.totalorder %s168, %s169
    %p183 = scmp.eq.s32.totalorder %s20, 1
    %p184 = por %p182, %p183
    %p186 = scmp.ne.s32.totalorder %s169, %s185
    %p187 = scmp.eq.s32.totalorder %s20, 0
    %p188 = por %p186, %p187
    %s189 = ssub.s32 %s14, %s21
    %p190 = scmp.eq.s32.totalorder %s189, 0
    %s192 = sadd.s32 %s191, 1
    %s193 = scalar_select %p190, %s191, %s192
    %p196 = pneg %p190
    %p197 = scmp.eq.s32.totalorder %s14, 1
    %p198 = por %p196, %p197
    %p199 = scmp.ne.s32.totalorder %s191, %s194
    %p200 = scmp.eq.s32.totalorder %s14, 0
    %p201 = por %p199, %p200
    %p202 = scmp.ne.s32.totalorder %s191, %s194
    %p203 = scmp.eq.s32.totalorder %s19, 1
    %p204 = por %p202, %p203
    %p205 = scmp.ne.s32.totalorder %s194, %s195
    %p206 = scmp.eq.s32.totalorder %s19, 0
    %p207 = por %p205, %p206
    %p208 = scmp.ne.s32.totalorder %s194, %s195
    %p209 = scmp.eq.s32.totalorder %s20, 1
    %p210 = por %p208, %p209
    %p212 = scmp.ne.s32.totalorder %s195, %s211
    %p213 = scmp.eq.s32.totalorder %s20, 0
    %p214 = por %p212, %p213
    %p215 = scmp.le.s32.totalorder 1, %s14
    %p216 = scmp.lt.s32.totalorder %s14, 3
    %p217 = pnand %p215, %p216
    %p218 = pneg %p217
    // Predicated region
    $region9: #{model_grad_update_lstm.1} parent=5 // pred_check
      _
    $region10: #{model_grad_update_lstm.1} parent=5 // pred_check_branch
      %220 = sbr.rel (%p217) target = $region12
    $region11: #{model_grad_update_lstm.1} parent=5 // pred_region
      %s221 = ssub.s32 %s14, 1
      // Predicated region
      $region13: #{model_grad_update_lstm.1} parent=11 // pred_check
        %p222 = pneg %p87
      $region14: #{model_grad_update_lstm.1} parent=11 // pred_check_branch
        %224 = sbr.rel (%p222) target = $region16
      $region15: #{model_grad_update_lstm.1} parent=11 // pred_region
        _
      $region16: #{model_grad_update_lstm.1} parent=11 // pred_fallthru
        _
      // Predicated region
      $region17: #{model_grad_update_lstm.1} parent=11 // pred_check
        %p225 = pneg %p108
      $region18: #{model_grad_update_lstm.1} parent=11 // pred_check_branch
        %227 = sbr.rel (%p225) target = $region20
      $region19: #{model_grad_update_lstm.1} parent=11 // pred_region
        _
      $region20: #{model_grad_update_lstm.1} parent=11 // pred_fallthru
        _
      // Predicated region
      $region21: #{model_grad_update_lstm.1} parent=11 // pred_check
        %p228 = pneg %p129
      $region22: #{model_grad_update_lstm.1} parent=11 // pred_check_branch
        %230 = sbr.rel (%p228) target = $region24
      $region23: #{model_grad_update_lstm.1} parent=11 // pred_region
        _
      $region24: #{model_grad_update_lstm.1} parent=11 // pred_fallthru
        _
    $region12: #{model_grad_update_lstm.1} parent=5 // pred_fallthru
      _
    %p231 = scmp.lt.s32.totalorder %s14, 2
    // Predicated region
    $region25: #{model_grad_update_lstm.1} parent=5 // pred_check
      %p232 = pneg %p231
    $region26: #{model_grad_update_lstm.1} parent=5 // pred_check_branch
      %234 = sbr.rel (%p232) target = $region28
    $region27: #{model_grad_update_lstm.1} parent=5 // pred_region
      // Predicated region
      $region29: #{model_grad_update_lstm.1} parent=27 // pred_check
        %p235 = pneg %p34
      $region30: #{model_grad_update_lstm.1} parent=27 // pred_check_branch
        %237 = sbr.rel (%p235) target = $region32
      $region31: #{model_grad_update_lstm.1} parent=27 // pred_region
        %p238 = scmp.lt.s32.totalorder %s14, 1
        %s239 = scalar_select %p238, %s14, 1
        %s240 = smul.addr %s239, 54
        %s241 = smul.addr %s240, 4
        %s242 = scalar_lea.vmem %s0, %s241
      $region32: #{model_grad_update_lstm.1} parent=27 // pred_fallthru
        _
      // Predicated region
      $region33: #{model_grad_update_lstm.1} parent=27 // pred_check
        %p243 = pneg %p60
      $region34: #{model_grad_update_lstm.1} parent=27 // pred_check_branch
        %245 = sbr.rel (%p243) target = $region36
      $region35: #{model_grad_update_lstm.1} parent=27 // pred_region
        %p246 = scmp.lt.s32.totalorder %s14, 1
        %s247 = scalar_select %p246, %s14, 1
        %s248 = smul.addr %s247, 6
        %s249 = smul.addr %s248, 8
        %s250 = scalar_lea.vmem %s1, %s249
      $region36: #{model_grad_update_lstm.1} parent=27 // pred_fallthru
        _
    $region28: #{model_grad_update_lstm.1} parent=5 // pred_fallthru
      _
    %p251 = scmp.le.s32.totalorder 1, %s14
    %p252 = scmp.lt.s32.totalorder %s14, 3
    %p253 = pnand %p251, %p252
    %p254 = pneg %p253
    // Predicated region
    $region37: #{model_grad_update_lstm.1} parent=5 // pred_check
      _
    $region38: #{model_grad_update_lstm.1} parent=5 // pred_check_branch
      %256 = sbr.rel (%p253) target = $region40
    $region39: #{model_grad_update_lstm.1} parent=5 // pred_region
      %s257 = ssub.s32 %s14, 1
      %p258 = scmp.lt.s32.totalorder %s19, 1
      %s259 = scalar_select %p258, %s19, 1
      %s260 = smul.addr %s259, 54
      %s261 = smul.addr %s260, 4
      %s262 = scalar_lea.vmem %s0, %s261
      %p263 = pneg %p40
      %p264 = pneg %p37
      %p265 = scmp.lt.s32.totalorder %s19, 1
      %s266 = scalar_select %p265, %s19, 1
      %s267 = smul.addr %s266, 6
      %s268 = smul.addr %s267, 8
      %s269 = scalar_lea.vmem %s1, %s268
      %p270 = pneg %p66
      %p271 = pneg %p63
      %p272 = pneg %p87
      %p273 = pneg %p84
      %p274 = pneg %p108
      %p275 = pneg %p105
      %p276 = pneg %p129
      %p277 = pneg %p126
      %p278 = pneg %p155
      %p279 = pneg %p152
      %p280 = scmp.lt.s32.totalorder %s19, 1
      %s281 = scalar_select %p280, %s19, 1
      %s282 = smul.addr %s281, 2
      %s283 = smul.addr %s282, 4
      %s284 = scalar_lea.vmem %s5, %s283
      %p285 = pneg %p181
      %p286 = pneg %p178
      %p287 = scmp.lt.s32.totalorder %s19, 1
      %s288 = scalar_select %p287, %s19, 1
      %s289 = smul.addr %s288, 6
      %s290 = smul.addr %s289, 8
      %s291 = scalar_lea.vmem %s6, %s290
      %p292 = pneg %p207
      %p293 = pneg %p204
      %p294 = scmp.lt.s32.totalorder %s19, 1
      %s295 = scalar_select %p294, %s19, 1
      %s296 = smul.addr %s295, 6
      %s297 = smul.addr %s296, 8
      %s298 = scalar_lea.vmem %s7, %s297
      %p299 = scmp.lt.s32.totalorder %s19, 1
      %s300 = scalar_select %p299, %s19, 1
      %s301 = smul.addr %s300, 54
      %s302 = smul.addr %s301, 4
      %s303 = scalar_lea.vmem %s0, %s302
      %p304 = scmp.lt.s32.totalorder %s19, 1
      %s305 = scalar_select %p304, %s19, 1
      %s306 = smul.addr %s305, 6
      %s307 = smul.addr %s306, 8
      %s308 = scalar_lea.vmem %s1, %s307
      %p309 = scmp.lt.s32.totalorder %s19, 1
      %s310 = scalar_select %p309, %s19, 1
      %s311 = smul.addr %s310, 2
      %s312 = smul.addr %s311, 4
      %s313 = scalar_lea.vmem %s5, %s312
      %p314 = scmp.lt.s32.totalorder %s19, 1
      %s315 = scalar_select %p314, %s19, 1
      %s316 = smul.addr %s315, 6
      %s317 = smul.addr %s316, 8
      %s318 = scalar_lea.vmem %s6, %s317
      %p319 = scmp.lt.s32.totalorder %s19, 1
      %s320 = scalar_select %p319, %s19, 1
      %s321 = smul.addr %s320, 6
      %s322 = smul.addr %s321, 8
      %s323 = scalar_lea.vmem %s7, %s322
      %v325 = vld [vmem:[%s2] sm:$0xff]
      %v326 = vld [vmem:[%s2 + $0x8] sm:$0xff]
      %v327 = vld [vmem:[%s2 + $0x10] sm:$0xff]
      %v328 = vld [vmem:[%s2 + $0x18] sm:$0xff]
      %v329 = vld [vmem:[%s2 + $0x20] sm:$0xff]
      %v330 = vld [vmem:[%s2 + $0x28] sm:$0xff]
      %v331 = vld [vmem:[%s2 + $0x30] sm:$0xff]
      %v332 = vld [vmem:[%s2 + $0x38] sm:$0xff]
      %v333 = vld [vmem:[%s2 + $0x40] sm:$0xff]
      %v334 = vld [vmem:[%s2 + $0x48] sm:$0xff]
      %v335 = vld [vmem:[%s2 + $0x50] sm:$0xff]
      %v336 = vld [vmem:[%s2 + $0x58] sm:$0xff]
      %v337 = vld [vmem:[%s3] sm:$0xff]
      %v338 = vld [vmem:[%s3 + $0x8] sm:$0xff]
      %v339 = vld [vmem:[%s3 + $0x10] sm:$0xff]
      %v340 = vld [vmem:[%s3 + $0x18] sm:$0xff]
      %v341 = vld [vmem:[%s3 + $0x20] sm:$0xff]
      %v342 = vld [vmem:[%s3 + $0x28] sm:$0xff]
      %v343 = vld [vmem:[%s3 + $0x30] sm:$0xff]
      %v344 = vld [vmem:[%s3 + $0x38] sm:$0xff]
      %v345 = vld [vmem:[%s3 + $0x40] sm:$0xff]
      %v346 = vld [vmem:[%s3 + $0x48] sm:$0xff]
      %v347 = vld [vmem:[%s3 + $0x50] sm:$0xff]
      %v348 = vld [vmem:[%s3 + $0x58] sm:$0xff]
      %v349 = vld [vmem:[%s4] sm:$0xf]
      %v350 = vld [vmem:[%s303] sm:$0xff]
      %v351 = vld [vmem:[%s303 + $0x8] sm:$0xff]
      %v352 = vld [vmem:[%s303 + $0x10] sm:$0xff]
      %v353 = vld [vmem:[%s303 + $0x18] sm:$0xff]
      %v354 = vld [vmem:[%s303 + $0x20] sm:$0xff]
      %v355 = vld [vmem:[%s303 + $0x28] sm:$0xff]
      %v356 = vld [vmem:[%s303 + $0x30] sm:$0xff]
      %v357 = vld [vmem:[%s303 + $0x38] sm:$0xff]
      %v358 = vld [vmem:[%s303 + $0x40] sm:$0xff]
      %v359 = vld [vmem:[%s303 + $0x48] sm:$0xff]
      %v360 = vld [vmem:[%s303 + $0x50] sm:$0xff]
      %v361 = vld [vmem:[%s303 + $0x58] sm:$0xff]
      %v362 = vld [vmem:[%s303 + $0x60] sm:$0xff]
      %v363 = vld [vmem:[%s303 + $0x68] sm:$0xff]
      %v364 = vld [vmem:[%s303 + $0x70] sm:$0xff]
      %v365 = vld [vmem:[%s303 + $0x78] sm:$0xff]
      %v366 = vld [vmem:[%s303 + $0x80] sm:$0xff]
      %v367 = vld [vmem:[%s303 + $0x88] sm:$0xff]
      %v368 = vld [vmem:[%s303 + $0x90] sm:$0xff]
      %v369 = vld [vmem:[%s303 + $0x98] sm:$0xff]
      %v370 = vld [vmem:[%s303 + $0xa0] sm:$0xff]
      %v371 = vld [vmem:[%s303 + $0xa8] sm:$0xff]
      %v372 = vld [vmem:[%s303 + $0xb0] sm:$0xff]
      %v373 = vld [vmem:[%s303 + $0xb8] sm:$0xff]
      %v374 = vld [vmem:[%s303 + $0xc0] sm:$0xff]
      %v375 = vld [vmem:[%s303 + $0xc8] sm:$0xff]
      %v376 = vld [vmem:[%s303 + $0xd0] sm:$0xff]
      %378 = vset.pattern.permute.xlu0 0
      %379 = vperm.xlu0 %378, %v337
      %v380 = vpop.permute.xlu0 %379
      %383 = vset.pattern.permute.xlu0 0
      %384 = vperm.xlu0 %383, %v338
      %v385 = vpop.permute.xlu0 %384
      %388 = vset.pattern.permute.xlu0 0
      %389 = vperm.xlu0 %388, %v339
      %v390 = vpop.permute.xlu0 %389
      %393 = vset.pattern.permute.xlu0 0
      %394 = vperm.xlu0 %393, %v340
      %v395 = vpop.permute.xlu0 %394
      %398 = vset.pattern.permute.xlu0 0
      %399 = vperm.xlu0 %398, %v341
      %v400 = vpop.permute.xlu0 %399
      %403 = vset.pattern.permute.xlu0 0
      %404 = vperm.xlu0 %403, %v342
      %v405 = vpop.permute.xlu0 %404
      %408 = vset.pattern.permute.xlu0 0
      %409 = vperm.xlu0 %408, %v343
      %v410 = vpop.permute.xlu0 %409
      %413 = vset.pattern.permute.xlu0 0
      %414 = vperm.xlu0 %413, %v344
      %v415 = vpop.permute.xlu0 %414
      %418 = vset.pattern.permute.xlu0 0
      %419 = vperm.xlu0 %418, %v345
      %v420 = vpop.permute.xlu0 %419
      %423 = vset.pattern.permute.xlu0 0
      %424 = vperm.xlu0 %423, %v346
      %v425 = vpop.permute.xlu0 %424
      %428 = vset.pattern.permute.xlu0 0
      %429 = vperm.xlu0 %428, %v347
      %v430 = vpop.permute.xlu0 %429
      %433 = vset.pattern.permute.xlu0 0
      %434 = vperm.xlu0 %433, %v348
      %v435 = vpop.permute.xlu0 %434
      %v449 = vunpack.c.l.b16 %v325
      %v450 = vunpack.c.h.b16 %v325
      %v451 = vunpack.c.l.b16 %v326
      %v452 = vunpack.c.h.b16 %v326
      %v453 = vunpack.c.l.b16 %v327
      %v454 = vunpack.c.h.b16 %v327
      %v455 = vunpack.c.l.b16 %v328
      %v456 = vunpack.c.h.b16 %v328
      %v457 = vunpack.c.l.b16 %v329
      %v458 = vunpack.c.h.b16 %v329
      %v459 = vunpack.c.l.b16 %v330
      %v460 = vunpack.c.h.b16 %v330
      %v461 = vunpack.c.l.b16 %v331
      %v462 = vunpack.c.h.b16 %v331
      %v463 = vunpack.c.l.b16 %v332
      %v464 = vunpack.c.h.b16 %v332
      %v465 = vunpack.c.l.b16 %v333
      %v466 = vunpack.c.h.b16 %v333
      %v467 = vunpack.c.l.b16 %v334
      %v468 = vunpack.c.h.b16 %v334
      %v469 = vunpack.c.l.b16 %v335
      %v470 = vunpack.c.h.b16 %v335
      %v471 = vunpack.c.l.b16 %v336
      %v472 = vunpack.c.h.b16 %v336
      %v473 = vpack.c.b16 %v451, %v449
      %v474 = vpack.c.b16 %v452, %v450
      %v475 = vpack.c.b16 %v455, %v453
      %v476 = vpack.c.b16 %v456, %v454
      %v477 = vpack.c.b16 %v459, %v457
      %v478 = vpack.c.b16 %v460, %v458
      %v479 = vpack.c.b16 %v463, %v461
      %v480 = vpack.c.b16 %v464, %v462
      %v481 = vpack.c.b16 %v467, %v465
      %v482 = vpack.c.b16 %v468, %v466
      %v483 = vpack.c.b16 %v471, %v469
      %v484 = vpack.c.b16 %v472, %v470
      %v518 = vunpack.c.l.b16 %v350
      %v519 = vunpack.c.h.b16 %v350
      %v520 = vunpack.c.l.b16 %v351
      %v521 = vunpack.c.h.b16 %v351
      %v522 = vunpack.c.l.b16 %v352
      %v523 = vunpack.c.h.b16 %v352
      %v524 = vunpack.c.l.b16 %v353
      %v525 = vunpack.c.h.b16 %v353
      %v526 = vunpack.c.l.b16 %v354
      %v527 = vunpack.c.h.b16 %v354
      %v528 = vunpack.c.l.b16 %v355
      %v529 = vunpack.c.h.b16 %v355
      %v530 = vunpack.c.l.b16 %v356
      %v531 = vunpack.c.h.b16 %v356
      %v532 = vunpack.c.l.b16 %v357
      %v533 = vunpack.c.h.b16 %v357
      %v534 = vunpack.c.l.b16 %v358
      %v535 = vunpack.c.h.b16 %v358
      %v536 = vunpack.c.l.b16 %v359
      %v537 = vunpack.c.h.b16 %v359
      %v538 = vunpack.c.l.b16 %v360
      %v539 = vunpack.c.h.b16 %v360
      %v540 = vunpack.c.l.b16 %v361
      %v541 = vunpack.c.h.b16 %v361
      %v542 = vunpack.c.l.b16 %v362
      %v543 = vunpack.c.h.b16 %v362
      %v544 = vunpack.c.l.b16 %v363
      %v545 = vunpack.c.h.b16 %v363
      %v546 = vunpack.c.l.b16 %v364
      %v547 = vunpack.c.h.b16 %v364
      %v548 = vunpack.c.l.b16 %v365
      %v549 = vunpack.c.h.b16 %v365
      %v550 = vunpack.c.l.b16 %v366
      %v551 = vunpack.c.h.b16 %v366
      %v552 = vunpack.c.l.b16 %v367
      %v553 = vunpack.c.h.b16 %v367
      %v554 = vunpack.c.l.b16 %v368
      %v555 = vunpack.c.h.b16 %v368
      %v556 = vunpack.c.l.b16 %v369
      %v557 = vunpack.c.h.b16 %v369
      %v558 = vunpack.c.l.b16 %v370
      %v559 = vunpack.c.h.b16 %v370
      %v560 = vunpack.c.l.b16 %v371
      %v561 = vunpack.c.h.b16 %v371
      %v562 = vunpack.c.l.b16 %v372
      %v563 = vunpack.c.h.b16 %v372
      %v564 = vunpack.c.l.b16 %v373
      %v565 = vunpack.c.h.b16 %v373
      %v566 = vunpack.c.l.b16 %v374
      %v567 = vunpack.c.h.b16 %v374
      %v568 = vunpack.c.l.b16 %v375
      %v569 = vunpack.c.h.b16 %v375
      %v570 = vunpack.c.l.b16 %v376
      %v571 = vunpack.c.h.b16 %v376
      %v572 = vpack.c.b16 %v520, %v518
      %v573 = vpack.c.b16 %v521, %v519
      %v574 = vpack.c.b16 %v524, %v522
      %v575 = vpack.c.b16 %v525, %v523
      %v576 = vpack.c.b16 %v528, %v526
      %v577 = vpack.c.b16 %v529, %v527
      %v578 = vpack.c.b16 %v532, %v530
      %v579 = vpack.c.b16 %v533, %v531
      %v580 = vpack.c.b16 %v536, %v534
      %v581 = vpack.c.b16 %v537, %v535
      %v582 = vpack.c.b16 %v540, %v538
      %v583 = vpack.c.b16 %v541, %v539
      %v584 = vpack.c.b16 %v544, %v542
      %v585 = vpack.c.b16 %v545, %v543
      %v586 = vpack.c.b16 %v548, %v546
      %v587 = vpack.c.b16 %v549, %v547
      %v588 = vpack.c.b16 %v552, %v550
      %v589 = vpack.c.b16 %v553, %v551
      %v590 = vpack.c.b16 %v556, %v554
      %v591 = vpack.c.b16 %v557, %v555
      %v592 = vpack.c.b16 %v560, %v558
      %v593 = vpack.c.b16 %v561, %v559
      %v594 = vpack.c.b16 %v564, %v562
      %v595 = vpack.c.b16 %v565, %v563
      %v596 = vpack.c.b16 %v568, %v566
      %v597 = vpack.c.b16 %v569, %v567
      %v598 = vpack.c.b16 %v570, %v570
      %v599 = vpack.c.b16 %v571, %v571
      %vm626 = vcmask 719872
      %v628 = vsel %vm626, %v474, 0
      %v631 = vsel %vm626, %v476, 0
      %v634 = vsel %vm626, %v478, 0
      %v637 = vsel %vm626, %v480, 0
      %v640 = vsel %vm626, %v482, 0
      %v643 = vsel %vm626, %v484, 0
      %vm645 = vcmask 1043456
      %v647 = vsel %vm645, %v598, 0
      %v650 = vsel %vm645, %v599, 0
      %652 = vmatpush.bf16.msra.mxu0 %v586
      %653 = vmatpush.bf16.msra.mxu0 %v584
      %654 = vmatpush.bf16.msra.mxu0 %v582
      %655 = vmatpush.bf16.msra.mxu0 %v580
      %656 = vmatpush.bf16.msra.mxu0 %v578
      %657 = vmatpush.bf16.msra.mxu0 %v576
      %658 = vmatpush.bf16.msra.mxu0 %v574
      %659 = vmatpush.bf16.msra.mxu0 %v572
      %660 = vmatmul.bf16.gmra.mxu0 %v473
      %v661 = vpop.f32.mrf.mxu0
      %v662 = vadd.f32 %v380, %v661
      %v663 = vpop.f32.mrf.mxu0
      %v664 = vadd.f32 %v385, %v663
      %665 = vmatmul.bf16.gmra.mxu0 %v475
      %v666 = vpop.f32.mrf.mxu0
      %v667 = vadd.f32 %v390, %v666
      %v668 = vpop.f32.mrf.mxu0
      %v669 = vadd.f32 %v395, %v668
      %670 = vmatmul.bf16.gmra.mxu0 %v477
      %v671 = vpop.f32.mrf.mxu0
      %v672 = vadd.f32 %v400, %v671
      %v673 = vpop.f32.mrf.mxu0
      %v674 = vadd.f32 %v405, %v673
      %675 = vmatmul.bf16.gmra.mxu0 %v479
      %v676 = vpop.f32.mrf.mxu0
      %v677 = vadd.f32 %v410, %v676
      %v678 = vpop.f32.mrf.mxu0
      %v679 = vadd.f32 %v415, %v678
      %680 = vmatmul.bf16.gmra.mxu0 %v481
      %v681 = vpop.f32.mrf.mxu0
      %v682 = vadd.f32 %v420, %v681
      %v683 = vpop.f32.mrf.mxu0
      %v684 = vadd.f32 %v425, %v683
      %685 = vmatmul.bf16.gmra.mxu0 %v483
      %v686 = vpop.f32.mrf.mxu0
      %v687 = vadd.f32 %v430, %v686
      %v688 = vpop.f32.mrf.mxu0
      %v689 = vadd.f32 %v435, %v688
      %690 = vdwg.mxu0
      %691 = vmatpush.bf16.msra.mxu0 0
      %692 = vmatpush.bf16.msra.mxu0 0
      %693 = vmatpush.bf16.msra.mxu0 %v647
      %694 = vmatpush.bf16.msra.mxu0 %v596
      %695 = vmatpush.bf16.msra.mxu0 %v594
      %696 = vmatpush.bf16.msra.mxu0 %v592
      %697 = vmatpush.bf16.msra.mxu0 %v590
      %698 = vmatpush.bf16.msra.mxu0 %v588
      %699 = vmatmul.bf16.gmra.mxu0 %v628
      %v700 = vpop.f32.mrf.mxu0
      %v701 = vadd.f32 %v662, %v700
      %v702 = vpop.f32.mrf.mxu0
      %v703 = vadd.f32 %v664, %v702
      %704 = vmatmul.bf16.gmra.mxu0 %v631
      %v705 = vpop.f32.mrf.mxu0
      %v706 = vadd.f32 %v667, %v705
      %v707 = vpop.f32.mrf.mxu0
      %v708 = vadd.f32 %v669, %v707
      %709 = vmatmul.bf16.gmra.mxu0 %v634
      %v710 = vpop.f32.mrf.mxu0
      %v711 = vadd.f32 %v672, %v710
      %v712 = vpop.f32.mrf.mxu0
      %v713 = vadd.f32 %v674, %v712
      %714 = vmatmul.bf16.gmra.mxu0 %v637
      %v715 = vpop.f32.mrf.mxu0
      %v716 = vadd.f32 %v677, %v715
      %v717 = vpop.f32.mrf.mxu0
      %v718 = vadd.f32 %v679, %v717
      %719 = vmatmul.bf16.gmra.mxu0 %v640
      %v720 = vpop.f32.mrf.mxu0
      %v721 = vadd.f32 %v682, %v720
      %v722 = vpop.f32.mrf.mxu0
      %v723 = vadd.f32 %v684, %v722
      %724 = vmatmul.bf16.gmra.mxu0 %v643
      %v725 = vpop.f32.mrf.mxu0
      %v726 = vadd.f32 %v687, %v725
      %v727 = vpop.f32.mrf.mxu0
      %v728 = vadd.f32 %v689, %v727
      %729 = vdwg.mxu0
      %730 = vmatpush.bf16.msra.mxu0 %v587
      %731 = vmatpush.bf16.msra.mxu0 %v585
      %732 = vmatpush.bf16.msra.mxu0 %v583
      %733 = vmatpush.bf16.msra.mxu0 %v581
      %734 = vmatpush.bf16.msra.mxu0 %v579
      %735 = vmatpush.bf16.msra.mxu0 %v577
      %736 = vmatpush.bf16.msra.mxu0 %v575
      %737 = vmatpush.bf16.msra.mxu0 %v573
      %738 = vmatmul.bf16.gmra.mxu0 %v473
      %v739 = vpop.f32.mrf.mxu0
      %v740 = vadd.f32 %v380, %v739
      %v741 = vpop.f32.mrf.mxu0
      %v742 = vadd.f32 %v385, %v741
      %743 = vmatmul.bf16.gmra.mxu0 %v475
      %v744 = vpop.f32.mrf.mxu0
      %v745 = vadd.f32 %v390, %v744
      %v746 = vpop.f32.mrf.mxu0
      %v747 = vadd.f32 %v395, %v746
      %748 = vmatmul.bf16.gmra.mxu0 %v477
      %v749 = vpop.f32.mrf.mxu0
      %v750 = vadd.f32 %v400, %v749
      %v751 = vpop.f32.mrf.mxu0
      %v752 = vadd.f32 %v405, %v751
      %753 = vmatmul.bf16.gmra.mxu0 %v479
      %v754 = vpop.f32.mrf.mxu0
      %v755 = vadd.f32 %v410, %v754
      %v756 = vpop.f32.mrf.mxu0
      %v757 = vadd.f32 %v415, %v756
      %758 = vmatmul.bf16.gmra.mxu0 %v481
      %v759 = vpop.f32.mrf.mxu0
      %v760 = vadd.f32 %v420, %v759
      %v761 = vpop.f32.mrf.mxu0
      %v762 = vadd.f32 %v425, %v761
      %763 = vmatmul.bf16.gmra.mxu0 %v483
      %v764 = vpop.f32.mrf.mxu0
      %v765 = vadd.f32 %v430, %v764
      %v766 = vpop.f32.mrf.mxu0
      %v767 = vadd.f32 %v435, %v766
      %768 = vdwg.mxu0
      %769 = vmatpush.bf16.msra.mxu0 0
      %770 = vmatpush.bf16.msra.mxu0 0
      %771 = vmatpush.bf16.msra.mxu0 %v650
      %772 = vmatpush.bf16.msra.mxu0 %v597
      %773 = vmatpush.bf16.msra.mxu0 %v595
      %774 = vmatpush.bf16.msra.mxu0 %v593
      %775 = vmatpush.bf16.msra.mxu0 %v591
      %776 = vmatpush.bf16.msra.mxu0 %v589
      %777 = vmatmul.bf16.gmra.mxu0 %v628
      %v778 = vpop.f32.mrf.mxu0
      %v779 = vadd.f32 %v740, %v778
      %v780 = vpop.f32.mrf.mxu0
      %v781 = vadd.f32 %v742, %v780
      %782 = vmatmul.bf16.gmra.mxu0 %v631
      %v783 = vpop.f32.mrf.mxu0
      %v784 = vadd.f32 %v745, %v783
      %v785 = vpop.f32.mrf.mxu0
      %v786 = vadd.f32 %v747, %v785
      %787 = vmatmul.bf16.gmra.mxu0 %v634
      %v788 = vpop.f32.mrf.mxu0
      %v789 = vadd.f32 %v750, %v788
      %v790 = vpop.f32.mrf.mxu0
      %v791 = vadd.f32 %v752, %v790
      %792 = vmatmul.bf16.gmra.mxu0 %v637
      %v793 = vpop.f32.mrf.mxu0
      %v794 = vadd.f32 %v755, %v793
      %v795 = vpop.f32.mrf.mxu0
      %v796 = vadd.f32 %v757, %v795
      %797 = vmatmul.bf16.gmra.mxu0 %v640
      %v798 = vpop.f32.mrf.mxu0
      %v799 = vadd.f32 %v760, %v798
      %v800 = vpop.f32.mrf.mxu0
      %v801 = vadd.f32 %v762, %v800
      %802 = vmatmul.bf16.gmra.mxu0 %v643
      %v803 = vpop.f32.mrf.mxu0
      %v804 = vadd.f32 %v765, %v803
      %v805 = vpop.f32.mrf.mxu0
      %v806 = vadd.f32 %v767, %v805
      %807 = vdwg.mxu0
      %v808 = vxor.u32 %v701, 2147483648
      %v809 = vxor.u32 %v779, 2147483648
      %v810 = vxor.u32 %v703, 2147483648
      %v811 = vxor.u32 %v781, 2147483648
      %v812 = vxor.u32 %v706, 2147483648
      %v813 = vxor.u32 %v784, 2147483648
      %v814 = vmul.f32 %v808, 1.442695
      %v815 = vpow.pop %v814
      %v816 = vmul.f32 %v809, 1.442695
      %v817 = vpow.pop %v816
      %v818 = vmul.f32 %v810, 1.442695
      %v819 = vpow.pop %v818
      %v820 = vmul.f32 %v811, 1.442695
      %v821 = vpow.pop %v820
      %v822 = vmul.f32 %v812, 1.442695
      %v823 = vpow.pop %v822
      %v824 = vmul.f32 %v813, 1.442695
      %v825 = vpow.pop %v824
      %v826 = vadd.f32 %v815, 1.0
      %v827 = vadd.f32 %v817, 1.0
      %v828 = vadd.f32 %v819, 1.0
      %v829 = vadd.f32 %v821, 1.0
      %v830 = vadd.f32 %v823, 1.0
      %v831 = vadd.f32 %v825, 1.0
      %v832 = vrcp.pop %v826
      %v833 = vmul.f32 %v826, %v832
      %v834 = vsub.f32 1.0, %v833
      %v835 = vmul.f32 %v832, %v834
      %v836 = vadd.f32 %v832, %v835
      %vm837 = vweird.f32 %v826
      %vm838 = vweird.f32 %v832
      %vm839 = vmor %vm837, %vm838
      %v840 = vsel %vm839, %v832, %v836
      %v841 = vand.u32 2147483647, %v826
      %vm842 = vcmp.eq.f32.partialorder %v841, 8.507059e+37
      %v843 = vand.u32 %v826, 2147483648
      %v844 = vor.u32 1.1754944e-38, %v843
      %v845 = vsel %vm842, %v844, %v840
      %v846 = vmul.f32 1.0, %v845
      %v847 = vrcp.pop %v827
      %v848 = vmul.f32 %v827, %v847
      %v849 = vsub.f32 1.0, %v848
      %v850 = vmul.f32 %v847, %v849
      %v851 = vadd.f32 %v847, %v850
      %vm852 = vweird.f32 %v827
      %vm853 = vweird.f32 %v847
      %vm854 = vmor %vm852, %vm853
      %v855 = vsel %vm854, %v847, %v851
      %v856 = vand.u32 2147483647, %v827
      %vm857 = vcmp.eq.f32.partialorder %v856, 8.507059e+37
      %v858 = vand.u32 %v827, 2147483648
      %v859 = vor.u32 1.1754944e-38, %v858
      %v860 = vsel %vm857, %v859, %v855
      %v861 = vmul.f32 1.0, %v860
      %v862 = vrcp.pop %v828
      %v863 = vmul.f32 %v828, %v862
      %v864 = vsub.f32 1.0, %v863
      %v865 = vmul.f32 %v862, %v864
      %v866 = vadd.f32 %v862, %v865
      %vm867 = vweird.f32 %v828
      %vm868 = vweird.f32 %v862
      %vm869 = vmor %vm867, %vm868
      %v870 = vsel %vm869, %v862, %v866
      %v871 = vand.u32 2147483647, %v828
      %vm872 = vcmp.eq.f32.partialorder %v871, 8.507059e+37
      %v873 = vand.u32 %v828, 2147483648
      %v874 = vor.u32 1.1754944e-38, %v873
      %v875 = vsel %vm872, %v874, %v870
      %v876 = vmul.f32 1.0, %v875
      %v877 = vrcp.pop %v829
      %v878 = vmul.f32 %v829, %v877
      %v879 = vsub.f32 1.0, %v878
      %v880 = vmul.f32 %v877, %v879
      %v881 = vadd.f32 %v877, %v880
      %vm882 = vweird.f32 %v829
      %vm883 = vweird.f32 %v877
      %vm884 = vmor %vm882, %vm883
      %v885 = vsel %vm884, %v877, %v881
      %v886 = vand.u32 2147483647, %v829
      %vm887 = vcmp.eq.f32.partialorder %v886, 8.507059e+37
      %v888 = vand.u32 %v829, 2147483648
      %v889 = vor.u32 1.1754944e-38, %v888
      %v890 = vsel %vm887, %v889, %v885
      %v891 = vmul.f32 1.0, %v890
      %v892 = vrcp.pop %v830
      %v893 = vmul.f32 %v830, %v892
      %v894 = vsub.f32 1.0, %v893
      %v895 = vmul.f32 %v892, %v894
      %v896 = vadd.f32 %v892, %v895
      %vm897 = vweird.f32 %v830
      %vm898 = vweird.f32 %v892
      %vm899 = vmor %vm897, %vm898
      %v900 = vsel %vm899, %v892, %v896
      %v901 = vand.u32 2147483647, %v830
      %vm902 = vcmp.eq.f32.partialorder %v901, 8.507059e+37
      %v903 = vand.u32 %v830, 2147483648
      %v904 = vor.u32 1.1754944e-38, %v903
      %v905 = vsel %vm902, %v904, %v900
      %v906 = vmul.f32 1.0, %v905
      %v907 = vrcp.pop %v831
      %v908 = vmul.f32 %v831, %v907
      %v909 = vsub.f32 1.0, %v908
      %v910 = vmul.f32 %v907, %v909
      %v911 = vadd.f32 %v907, %v910
      %vm912 = vweird.f32 %v831
      %vm913 = vweird.f32 %v907
      %vm914 = vmor %vm912, %vm913
      %v915 = vsel %vm914, %v907, %v911
      %v916 = vand.u32 2147483647, %v831
      %vm917 = vcmp.eq.f32.partialorder %v916, 8.507059e+37
      %v918 = vand.u32 %v831, 2147483648
      %v919 = vor.u32 1.1754944e-38, %v918
      %v920 = vsel %vm917, %v919, %v915
      %v921 = vmul.f32 1.0, %v920
      %v922 = vxor.u32 %v708, 2147483648
      %v923 = vxor.u32 %v786, 2147483648
      %v924 = vxor.u32 %v711, 2147483648
      %v925 = vxor.u32 %v789, 2147483648
      %v926 = vxor.u32 %v713, 2147483648
      %v927 = vxor.u32 %v791, 2147483648
      %v928 = vmul.f32 %v922, 1.442695
      %v929 = vpow.pop %v928
      %v930 = vmul.f32 %v923, 1.442695
      %v931 = vpow.pop %v930
      %v932 = vmul.f32 %v924, 1.442695
      %v933 = vpow.pop %v932
      %v934 = vmul.f32 %v925, 1.442695
      %v935 = vpow.pop %v934
      %v936 = vmul.f32 %v926, 1.442695
      %v937 = vpow.pop %v936
      %v938 = vmul.f32 %v927, 1.442695
      %v939 = vpow.pop %v938
      %v940 = vadd.f32 %v929, 1.0
      %v941 = vadd.f32 %v931, 1.0
      %v942 = vadd.f32 %v933, 1.0
      %v943 = vadd.f32 %v935, 1.0
      %v944 = vadd.f32 %v937, 1.0
      %v945 = vadd.f32 %v939, 1.0
      %v946 = vrcp.pop %v940
      %v947 = vmul.f32 %v940, %v946
      %v948 = vsub.f32 1.0, %v947
      %v949 = vmul.f32 %v946, %v948
      %v950 = vadd.f32 %v946, %v949
      %vm951 = vweird.f32 %v940
      %vm952 = vweird.f32 %v946
      %vm953 = vmor %vm951, %vm952
      %v954 = vsel %vm953, %v946, %v950
      %v955 = vand.u32 2147483647, %v940
      %vm956 = vcmp.eq.f32.partialorder %v955, 8.507059e+37
      %v957 = vand.u32 %v940, 2147483648
      %v958 = vor.u32 1.1754944e-38, %v957
      %v959 = vsel %vm956, %v958, %v954
      %v960 = vmul.f32 1.0, %v959
      %v961 = vrcp.pop %v941
      %v962 = vmul.f32 %v941, %v961
      %v963 = vsub.f32 1.0, %v962
      %v964 = vmul.f32 %v961, %v963
      %v965 = vadd.f32 %v961, %v964
      %vm966 = vweird.f32 %v941
      %vm967 = vweird.f32 %v961
      %vm968 = vmor %vm966, %vm967
      %v969 = vsel %vm968, %v961, %v965
      %v970 = vand.u32 2147483647, %v941
      %vm971 = vcmp.eq.f32.partialorder %v970, 8.507059e+37
      %v972 = vand.u32 %v941, 2147483648
      %v973 = vor.u32 1.1754944e-38, %v972
      %v974 = vsel %vm971, %v973, %v969
      %v975 = vmul.f32 1.0, %v974
      %v976 = vrcp.pop %v942
      %v977 = vmul.f32 %v942, %v976
      %v978 = vsub.f32 1.0, %v977
      %v979 = vmul.f32 %v976, %v978
      %v980 = vadd.f32 %v976, %v979
      %vm981 = vweird.f32 %v942
      %vm982 = vweird.f32 %v976
      %vm983 = vmor %vm981, %vm982
      %v984 = vsel %vm983, %v976, %v980
      %v985 = vand.u32 2147483647, %v942
      %vm986 = vcmp.eq.f32.partialorder %v985, 8.507059e+37
      %v987 = vand.u32 %v942, 2147483648
      %v988 = vor.u32 1.1754944e-38, %v987
      %v989 = vsel %vm986, %v988, %v984
      %v990 = vmul.f32 1.0, %v989
      %v991 = vrcp.pop %v943
      %v992 = vmul.f32 %v943, %v991
      %v993 = vsub.f32 1.0, %v992
      %v994 = vmul.f32 %v991, %v993
      %v995 = vadd.f32 %v991, %v994
      %vm996 = vweird.f32 %v943
      %vm997 = vweird.f32 %v991
      %vm998 = vmor %vm996, %vm997
      %v999 = vsel %vm998, %v991, %v995
      %v1000 = vand.u32 2147483647, %v943
      %vm1001 = vcmp.eq.f32.partialorder %v1000, 8.507059e+37
      %v1002 = vand.u32 %v943, 2147483648
      %v1003 = vor.u32 1.1754944e-38, %v1002
      %v1004 = vsel %vm1001, %v1003, %v999
      %v1005 = vmul.f32 1.0, %v1004
      %v1006 = vrcp.pop %v944
      %v1007 = vmul.f32 %v944, %v1006
      %v1008 = vsub.f32 1.0, %v1007
      %v1009 = vmul.f32 %v1006, %v1008
      %v1010 = vadd.f32 %v1006, %v1009
      %vm1011 = vweird.f32 %v944
      %vm1012 = vweird.f32 %v1006
      %vm1013 = vmor %vm1011, %vm1012
      %v1014 = vsel %vm1013, %v1006, %v1010
      %v1015 = vand.u32 2147483647, %v944
      %vm1016 = vcmp.eq.f32.partialorder %v1015, 8.507059e+37
      %v1017 = vand.u32 %v944, 2147483648
      %v1018 = vor.u32 1.1754944e-38, %v1017
      %v1019 = vsel %vm1016, %v1018, %v1014
      %v1020 = vmul.f32 1.0, %v1019
      %v1021 = vrcp.pop %v945
      %v1022 = vmul.f32 %v945, %v1021
      %v1023 = vsub.f32 1.0, %v1022
      %v1024 = vmul.f32 %v1021, %v1023
      %v1025 = vadd.f32 %v1021, %v1024
      %vm1026 = vweird.f32 %v945
      %vm1027 = vweird.f32 %v1021
      %vm1028 = vmor %vm1026, %vm1027
      %v1029 = vsel %vm1028, %v1021, %v1025
      %v1030 = vand.u32 2147483647, %v945
      %vm1031 = vcmp.eq.f32.partialorder %v1030, 8.507059e+37
      %v1032 = vand.u32 %v945, 2147483648
      %v1033 = vor.u32 1.1754944e-38, %v1032
      %v1034 = vsel %vm1031, %v1033, %v1029
      %v1035 = vmul.f32 1.0, %v1034
      %v1036 = vxor.u32 %v716, 2147483648
      %v1037 = vxor.u32 %v794, 2147483648
      %v1038 = vxor.u32 %v718, 2147483648
      %v1039 = vxor.u32 %v796, 2147483648
      %v1040 = vxor.u32 %v721, 2147483648
      %v1041 = vxor.u32 %v799, 2147483648
      %v1042 = vmul.f32 %v1036, 1.442695
      %v1043 = vpow.pop %v1042
      %v1044 = vmul.f32 %v1037, 1.442695
      %v1045 = vpow.pop %v1044
      %v1046 = vmul.f32 %v1038, 1.442695
      %v1047 = vpow.pop %v1046
      %v1048 = vmul.f32 %v1039, 1.442695
      %v1049 = vpow.pop %v1048
      %v1050 = vmul.f32 %v1040, 1.442695
      %v1051 = vpow.pop %v1050
      %v1052 = vmul.f32 %v1041, 1.442695
      %v1053 = vpow.pop %v1052
      %v1054 = vadd.f32 %v1043, 1.0
      %v1055 = vadd.f32 %v1045, 1.0
      %v1056 = vadd.f32 %v1047, 1.0
      %v1057 = vadd.f32 %v1049, 1.0
      %v1058 = vadd.f32 %v1051, 1.0
      %v1059 = vadd.f32 %v1053, 1.0
      %v1060 = vrcp.pop %v1054
      %v1061 = vmul.f32 %v1054, %v1060
      %v1062 = vsub.f32 1.0, %v1061
      %v1063 = vmul.f32 %v1060, %v1062
      %v1064 = vadd.f32 %v1060, %v1063
      %vm1065 = vweird.f32 %v1054
      %vm1066 = vweird.f32 %v1060
      %vm1067 = vmor %vm1065, %vm1066
      %v1068 = vsel %vm1067, %v1060, %v1064
      %v1069 = vand.u32 2147483647, %v1054
      %vm1070 = vcmp.eq.f32.partialorder %v1069, 8.507059e+37
      %v1071 = vand.u32 %v1054, 2147483648
      %v1072 = vor.u32 1.1754944e-38, %v1071
      %v1073 = vsel %vm1070, %v1072, %v1068
      %v1074 = vmul.f32 1.0, %v1073
      %v1075 = vrcp.pop %v1055
      %v1076 = vmul.f32 %v1055, %v1075
      %v1077 = vsub.f32 1.0, %v1076
      %v1078 = vmul.f32 %v1075, %v1077
      %v1079 = vadd.f32 %v1075, %v1078
      %vm1080 = vweird.f32 %v1055
      %vm1081 = vweird.f32 %v1075
      %vm1082 = vmor %vm1080, %vm1081
      %v1083 = vsel %vm1082, %v1075, %v1079
      %v1084 = vand.u32 2147483647, %v1055
      %vm1085 = vcmp.eq.f32.partialorder %v1084, 8.507059e+37
      %v1086 = vand.u32 %v1055, 2147483648
      %v1087 = vor.u32 1.1754944e-38, %v1086
      %v1088 = vsel %vm1085, %v1087, %v1083
      %v1089 = vmul.f32 1.0, %v1088
      %v1090 = vrcp.pop %v1056
      %v1091 = vmul.f32 %v1056, %v1090
      %v1092 = vsub.f32 1.0, %v1091
      %v1093 = vmul.f32 %v1090, %v1092
      %v1094 = vadd.f32 %v1090, %v1093
      %vm1095 = vweird.f32 %v1056
      %vm1096 = vweird.f32 %v1090
      %vm1097 = vmor %vm1095, %vm1096
      %v1098 = vsel %vm1097, %v1090, %v1094
      %v1099 = vand.u32 2147483647, %v1056
      %vm1100 = vcmp.eq.f32.partialorder %v1099, 8.507059e+37
      %v1101 = vand.u32 %v1056, 2147483648
      %v1102 = vor.u32 1.1754944e-38, %v1101
      %v1103 = vsel %vm1100, %v1102, %v1098
      %v1104 = vmul.f32 1.0, %v1103
      %v1105 = vrcp.pop %v1057
      %v1106 = vmul.f32 %v1057, %v1105
      %v1107 = vsub.f32 1.0, %v1106
      %v1108 = vmul.f32 %v1105, %v1107
      %v1109 = vadd.f32 %v1105, %v1108
      %vm1110 = vweird.f32 %v1057
      %vm1111 = vweird.f32 %v1105
      %vm1112 = vmor %vm1110, %vm1111
      %v1113 = vsel %vm1112, %v1105, %v1109
      %v1114 = vand.u32 2147483647, %v1057
      %vm1115 = vcmp.eq.f32.partialorder %v1114, 8.507059e+37
      %v1116 = vand.u32 %v1057, 2147483648
      %v1117 = vor.u32 1.1754944e-38, %v1116
      %v1118 = vsel %vm1115, %v1117, %v1113
      %v1119 = vmul.f32 1.0, %v1118
      %v1120 = vrcp.pop %v1058
      %v1121 = vmul.f32 %v1058, %v1120
      %v1122 = vsub.f32 1.0, %v1121
      %v1123 = vmul.f32 %v1120, %v1122
      %v1124 = vadd.f32 %v1120, %v1123
      %vm1125 = vweird.f32 %v1058
      %vm1126 = vweird.f32 %v1120
      %vm1127 = vmor %vm1125, %vm1126
      %v1128 = vsel %vm1127, %v1120, %v1124
      %v1129 = vand.u32 2147483647, %v1058
      %vm1130 = vcmp.eq.f32.partialorder %v1129, 8.507059e+37
      %v1131 = vand.u32 %v1058, 2147483648
      %v1132 = vor.u32 1.1754944e-38, %v1131
      %v1133 = vsel %vm1130, %v1132, %v1128
      %v1134 = vmul.f32 1.0, %v1133
      %v1135 = vrcp.pop %v1059
      %v1136 = vmul.f32 %v1059, %v1135
      %v1137 = vsub.f32 1.0, %v1136
      %v1138 = vmul.f32 %v1135, %v1137
      %v1139 = vadd.f32 %v1135, %v1138
      %vm1140 = vweird.f32 %v1059
      %vm1141 = vweird.f32 %v1135
      %vm1142 = vmor %vm1140, %vm1141
      %v1143 = vsel %vm1142, %v1135, %v1139
      %v1144 = vand.u32 2147483647, %v1059
      %vm1145 = vcmp.eq.f32.partialorder %v1144, 8.507059e+37
      %v1146 = vand.u32 %v1059, 2147483648
      %v1147 = vor.u32 1.1754944e-38, %v1146
      %v1148 = vsel %vm1145, %v1147, %v1143
      %v1149 = vmul.f32 1.0, %v1148
      %v1150 = vtanh.pop %v723
      %v1151 = vtanh.pop %v801
      %v1152 = vtanh.pop %v726
      %v1153 = vtanh.pop %v804
      %v1154 = vtanh.pop %v728
      %v1155 = vtanh.pop %v806
      %v1156 = vld [vmem:[%s308] sm:$0xff]
      %v1157 = vld [vmem:[%s308 + $0x8] sm:$0xff]
      %v1158 = vld [vmem:[%s308 + $0x10] sm:$0xff]
      %v1159 = vld [vmem:[%s308 + $0x18] sm:$0xff]
      %v1160 = vld [vmem:[%s308 + $0x20] sm:$0xf]
      %v1161 = vld [vmem:[%s308 + $0x28] sm:$0xf]
      %v1162 = vmul.f32 %v960, %v1156
      %v1163 = vmul.f32 %v975, %v1157
      %v1164 = vmul.f32 %v990, %v1158
      %v1165 = vmul.f32 %v1005, %v1159
      %v1166 = vmul.f32 %v1020, %v1160
      %v1167 = vmul.f32 %v1035, %v1161
      %v1168 = vmul.f32 %v846, %v1150
      %v1169 = vmul.f32 %v861, %v1151
      %v1170 = vmul.f32 %v876, %v1152
      %v1171 = vmul.f32 %v891, %v1153
      %v1172 = vmul.f32 %v906, %v1154
      %v1173 = vmul.f32 %v921, %v1155
      %v1174 = vadd.f32 %v1162, %v1168
      %v1175 = vadd.f32 %v1163, %v1169
      %v1176 = vadd.f32 %v1164, %v1170
      %v1177 = vadd.f32 %v1165, %v1171
      %v1178 = vadd.f32 %v1166, %v1172
      %v1179 = vadd.f32 %v1167, %v1173
      %v1180 = vtanh.pop %v1174
      %v1181 = vtanh.pop %v1175
      %v1182 = vtanh.pop %v1176
      %v1183 = vtanh.pop %v1177
      %v1184 = vtanh.pop %v1178
      %v1185 = vtanh.pop %v1179
      %v1186 = vmul.f32 %v1074, %v1180
      %v1187 = vmul.f32 %v1089, %v1181
      %v1188 = vmul.f32 %v1104, %v1182
      %v1189 = vmul.f32 %v1119, %v1183
      %v1190 = vmul.f32 %v1134, %v1184
      %v1191 = vmul.f32 %v1149, %v1185
      %vm1192 = vcmask 162816
      %v1194 = vsel %vm1192, %v349, 0
      %v1197 = vsel %vm645, %v1190, 0
      %v1200 = vsel %vm645, %v1191, 0
      %1202 = vmatpush.msra.mxu0 0.0
      %1203 = vmatpush.msra.mxu0 0.0
      %1204 = vmatpush.msra.mxu0 0.0
      %1205 = vmatpush.msra.mxu0 0.0
      %1206 = vmatpush.msra.mxu0 0.0
      %1207 = vmatpush.msra.mxu0 0.0
      %1208 = vmatpush.msra.mxu0 0.0
      %1209 = vmatpush.msra.mxu0 0.0
      %1210 = vmatpush.msra.mxu0 0.0
      %1211 = vmatpush.msra.mxu0 0.0
      %1212 = vmatpush.msra.mxu0 0.0
      %1213 = vmatpush.msra.mxu0 0.0
      %1214 = vmatpush.msra.mxu0 0.0
      %1215 = vmatpush.msra.mxu0 %v1197
      %1216 = vmatpush.msra.mxu0 %v1188
      %1217 = vmatpush.msra.mxu0 %v1186
      %1218 = vmatmul.f32.gmra.mxu0 %v1194
      %v1219 = vpop.f32.mrf.mxu0
      %v1220 = vadd.f32 0.0, %v1219
      %1221 = vdwg.mxu0
      %1222 = vmatpush.msra.mxu0 0.0
      %1223 = vmatpush.msra.mxu0 0.0
      %1224 = vmatpush.msra.mxu0 0.0
      %1225 = vmatpush.msra.mxu0 0.0
      %1226 = vmatpush.msra.mxu0 0.0
      %1227 = vmatpush.msra.mxu0 0.0
      %1228 = vmatpush.msra.mxu0 0.0
      %1229 = vmatpush.msra.mxu0 0.0
      %1230 = vmatpush.msra.mxu0 0.0
      %1231 = vmatpush.msra.mxu0 0.0
      %1232 = vmatpush.msra.mxu0 0.0
      %1233 = vmatpush.msra.mxu0 0.0
      %1234 = vmatpush.msra.mxu0 0.0
      %1235 = vmatpush.msra.mxu0 %v1200
      %1236 = vmatpush.msra.mxu0 %v1189
      %1237 = vmatpush.msra.mxu0 %v1187
      %1238 = vmatmul.f32.gmra.mxu0 %v1194
      %v1239 = vpop.f32.mrf.mxu0
      %v1240 = vadd.f32 0.0, %v1239
      %1241 = vdwg.mxu0
      %1242 = vst [vmem:[%s318] sm:$0xff] %v1186
      %1243 = vst [vmem:[%s318 + $0x8] sm:$0xff] %v1187
      %1244 = vst [vmem:[%s318 + $0x10] sm:$0xff] %v1188
      %1245 = vst [vmem:[%s318 + $0x18] sm:$0xff] %v1189
      %1246 = vst [vmem:[%s318 + $0x20] sm:$0xf] %v1190
      %1247 = vst [vmem:[%s318 + $0x28] sm:$0xf] %v1191
      %1248 = vst [vmem:[%s323] sm:$0xff] %v1174
      %1249 = vst [vmem:[%s323 + $0x8] sm:$0xff] %v1175
      %1250 = vst [vmem:[%s323 + $0x10] sm:$0xff] %v1176
      %1251 = vst [vmem:[%s323 + $0x18] sm:$0xff] %v1177
      %1252 = vst [vmem:[%s323 + $0x20] sm:$0xf] %v1178
      %1253 = vst [vmem:[%s323 + $0x28] sm:$0xf] %v1179
      %v1256 = vrot.slane %v1240, 4
      %v1257 = vsel %vm645, %v1220, %v1256
      %1259 = vst [vmem:[%s313] sm:$0xff] %v1257
      %p1260 = scmp.lt.s32.totalorder %s19, 1
      %s1261 = scalar_select %p1260, %s19, 1
      %s1262 = smul.addr %s1261, 2
      %s1263 = smul.addr %s1262, 4
      %s1264 = scalar_lea.vmem %s5, %s1263
      %p1265 = scmp.lt.s32.totalorder %s19, 1
      %s1266 = scalar_select %p1265, %s19, 1
      %s1267 = smul.addr %s1266, 6
      %s1268 = smul.addr %s1267, 8
      %s1269 = scalar_lea.vmem %s6, %s1268
      %p1270 = scmp.lt.s32.totalorder %s19, 1
      %s1271 = scalar_select %p1270, %s19, 1
      %s1272 = smul.addr %s1271, 6
      %s1273 = smul.addr %s1272, 8
      %s1274 = scalar_lea.vmem %s7, %s1273
      // Predicated region
      $region41: #{model_grad_update_lstm.1} parent=39 // pred_check
        %p1275 = pneg %p152
      $region42: #{model_grad_update_lstm.1} parent=39 // pred_check_branch
        %1277 = sbr.rel (%p1275) target = $region44
      $region43: #{model_grad_update_lstm.1} parent=39 // pred_region
        _
      $region44: #{model_grad_update_lstm.1} parent=39 // pred_fallthru
        _
      // Predicated region
      $region45: #{model_grad_update_lstm.1} parent=39 // pred_check
        %p1278 = pneg %p178
      $region46: #{model_grad_update_lstm.1} parent=39 // pred_check_branch
        %1280 = sbr.rel (%p1278) target = $region48
      $region47: #{model_grad_update_lstm.1} parent=39 // pred_region
        _
      $region48: #{model_grad_update_lstm.1} parent=39 // pred_fallthru
        _
      // Predicated region
      $region49: #{model_grad_update_lstm.1} parent=39 // pred_check
        %p1281 = pneg %p204
      $region50: #{model_grad_update_lstm.1} parent=39 // pred_check_branch
        %1283 = sbr.rel (%p1281) target = $region52
      $region51: #{model_grad_update_lstm.1} parent=39 // pred_region
        _
      $region52: #{model_grad_update_lstm.1} parent=39 // pred_fallthru
        _
    $region40: #{model_grad_update_lstm.1} parent=5 // pred_fallthru
      _
    %p1284 = scmp.le.s32.totalorder 2, %s14
    // Predicated region
    $region53: #{model_grad_update_lstm.1} parent=5 // pred_check
      %p1285 = pneg %p1284
    $region54: #{model_grad_update_lstm.1} parent=5 // pred_check_branch
      %1287 = sbr.rel (%p1285) target = $region56
    $region55: #{model_grad_update_lstm.1} parent=5 // pred_region
      %s1288 = ssub.s32 %s14, 2
      // Predicated region
      $region57: #{model_grad_update_lstm.1} parent=55 // pred_check
        %p1289 = pneg %p158
      $region58: #{model_grad_update_lstm.1} parent=55 // pred_check_branch
        %1291 = sbr.rel (%p1289) target = $region60
      $region59: #{model_grad_update_lstm.1} parent=55 // pred_region
        %p1292 = scmp.lt.s32.totalorder %s20, 1
        %s1293 = scalar_select %p1292, %s20, 1
        %s1294 = smul.addr %s1293, 2
        %s1295 = smul.addr %s1294, 4
        %s1296 = scalar_lea.vmem %s5, %s1295
      $region60: #{model_grad_update_lstm.1} parent=55 // pred_fallthru
        _
      // Predicated region
      $region61: #{model_grad_update_lstm.1} parent=55 // pred_check
        %p1297 = pneg %p184
      $region62: #{model_grad_update_lstm.1} parent=55 // pred_check_branch
        %1299 = sbr.rel (%p1297) target = $region64
      $region63: #{model_grad_update_lstm.1} parent=55 // pred_region
        %p1300 = scmp.lt.s32.totalorder %s20, 1
        %s1301 = scalar_select %p1300, %s20, 1
        %s1302 = smul.addr %s1301, 6
        %s1303 = smul.addr %s1302, 8
        %s1304 = scalar_lea.vmem %s6, %s1303
      $region64: #{model_grad_update_lstm.1} parent=55 // pred_fallthru
        _
      // Predicated region
      $region65: #{model_grad_update_lstm.1} parent=55 // pred_check
        %p1305 = pneg %p210
      $region66: #{model_grad_update_lstm.1} parent=55 // pred_check_branch
        %1307 = sbr.rel (%p1305) target = $region68
      $region67: #{model_grad_update_lstm.1} parent=55 // pred_region
        %p1308 = scmp.lt.s32.totalorder %s20, 1
        %s1309 = scalar_select %p1308, %s20, 1
        %s1310 = smul.addr %s1309, 6
        %s1311 = smul.addr %s1310, 8
        %s1312 = scalar_lea.vmem %s7, %s1311
      $region68: #{model_grad_update_lstm.1} parent=55 // pred_fallthru
        _
    $region56: #{model_grad_update_lstm.1} parent=5 // pred_fallthru
      _
  $region6: #{model_grad_update_lstm.1} parent=0 // loop_footer
    %s18 = sadd.s32 1, %s14
  $region7: #{model_grad_update_lstm.1} parent=0 // loop_footer_branch
    %13 = sbr.rel target = $region3
  $region8: #{model_grad_update_lstm.1} parent=0 // loop_exit
    _

</llo_original>
